<compile_context>
chip_gen: v7x
topology: tpu7x:2x2x1
jax: 0.10.0
libtpu: 0.0.40
codegen_flags: <defaults>
</compile_context>

<pallas_src>
import functools

import jax
import jax.numpy as jnp
from jax.experimental import pallas as pl
from jax.experimental.pallas import tpu as pltpu

GN_EPS = 1e-5  # nn.GroupNorm default eps


# --------------------------------------------------------------------------
# Kernels
# --------------------------------------------------------------------------
def _fused_kernel(params_ref, xa_ref, xb_ref, o_ref):
    """Single-pass path.

    xa/xb: (rows, hw) blocks of paired shuffle groups (first / second channel
    half); o: (rows, 2*hw) lane-dense block of the already-shuffled output.
    params: (rows, 8) packed table [cw, cb, sw, sb, gn_w, gn_b, pad, pad];
    zero-padding makes the channel-/spatial-attention contributions
    complementary, so one scale/bias expression covers both branches.
    """
    hw = xa_ref.shape[-1]
    inv_hw = 1.0 / hw

    p = params_ref[...]
    cw, cb = p[:, 0:1], p[:, 1:2]      # channel-attention affine (0 on GN rows)
    sw, sbv = p[:, 2:3], p[:, 3:4]     # spatial-attention affine (0 on ch rows)
    gw, gbv = p[:, 4:5], p[:, 5:6]     # GroupNorm affine

    def gate_mul(x_raw):
        x = x_raw.astype(jnp.float32)
        s = jnp.sum(x, axis=-1, keepdims=True)
        sq = jnp.sum(x * x, axis=-1, keepdims=True)
        mean = s * inv_hw
        var = jnp.maximum(sq * inv_hw - mean * mean, 0.0)   # one-pass variance
        invstd = jax.lax.rsqrt(var + GN_EPS)
        scale = sw * gw * invstd                            # 0 for channel rows
        bias = sw * gbv + sbv + cw * mean + cb - scale * mean
        z = scale * x + bias
        gate = 0.5 * jnp.tanh(0.5 * z) + 0.5                # sigmoid via EUP tanh
        return (x * gate).astype(o_ref.dtype)

    # Fused channel_shuffle(groups=2): out channel 2*q+p; p=0 <- first half (xa),
    # p=1 <- partner group in the second half (xb).  Lane-dense full-width stores.
    o_ref[:, :hw] = gate_mul(xa_ref[...])
    o_ref[:, hw:] = gate_mul(xb_ref[...])


def _stats_kernel(params_ref, x_ref, sb_out_ref, sum_ref, sq_ref, *, inv_hw):
    """Tiled fallback, pass 1: per-channel gate scale/bias.

    Grid (b, half, group-block, hw-tile); the hw-tile axis is last/arbitrary and
    accumulates sum / sum-sq into VMEM scratch; scale/bias written on last tile.
    """
    t = pl.program_id(3)

    @pl.when(t == 0)
    def _():
        sum_ref[...] = jnp.zeros_like(sum_ref)
        sq_ref[...] = jnp.zeros_like(sq_ref)

    x = x_ref[...].astype(jnp.float32)
    sum_ref[...] += jnp.sum(x, axis=-1, keepdims=True)
    sq_ref[...] += jnp.sum(x * x, axis=-1, keepdims=True)

    @pl.when(t == pl.num_programs(3) - 1)
    def _():
        p = params_ref[...]
        cw, cb = p[:, 0:1], p[:, 1:2]
        sw, sbv = p[:, 2:3], p[:, 3:4]
        gw, gbv = p[:, 4:5], p[:, 5:6]
        mean = sum_ref[...] * inv_hw
        var = jnp.maximum(sq_ref[...] * inv_hw - mean * mean, 0.0)
        invstd = jax.lax.rsqrt(var + GN_EPS)
        scale = sw * gw * invstd
        bias = sw * gbv + sbv + cw * mean + cb - scale * mean
        sb_out_ref[:, 0:1] = scale
        sb_out_ref[:, 1:2] = bias


def _apply_kernel(sb_ref, x_ref, o_ref):
    """Tiled fallback, pass 2: out = x * sigmoid(scale*x + bias) per hw tile."""
    stats = sb_ref[...]
    scale = stats[:, 0:1]
    bias = stats[:, 1:2]
    x = x_ref[...].astype(jnp.float32)
    gate = 0.5 * jnp.tanh(0.5 * (scale * x + bias)) + 0.5
    o_ref[...] = (x * gate).astype(o_ref.dtype)


# --------------------------------------------------------------------------
# Planning helpers
# --------------------------------------------------------------------------
def _vmem_capacity_bytes():
    try:
        info = pltpu.get_tpu_info()
        cap = getattr(info, "vmem_capacity_bytes", None)
        if cap:
            return int(cap)
    except Exception:
        pass
    return 64 * 1024 * 1024   # conservative default (v7x per-TensorCore)


def _plan_blocks(b, G, c_g, hw, itemsize, budget_bytes):
    """Return (mode, groups_per_block, spatial_tile)."""
    g_half = G // 2
    # Hard sublane constraint: rows % 8 == 0, or the full-channel-half block.
    cands = [gb for gb in range(1, g_half + 1)
             if g_half % gb == 0 and ((gb * c_g) % 8 == 0 or gb == g_half)]

    def est_fused(gb):   # double-buffered in/out + f32 temps, per grid step
        return gb * c_g * hw * (8 * itemsize + 16)

    fitting = [gb for gb in cands if est_fused(gb) <= budget_bytes]
    if fitting:
        if b == 1:
            # Keep >= 2 grid steps so both v7x TensorCores get work.
            multi = [gb for gb in fitting if g_half // gb >= 2]
            return ("fused", max(multi) if multi else max(fitting), hw)
        return ("fused", max(fitting), hw)

    # Even the smallest legal group block exceeds the budget -> spatial tiling.
    gb = min(cands)
    rows = gb * c_g
    if hw % 128 == 0:
        th = None
        for cand in range(128, hw + 1, 128):
            if hw % cand == 0 and rows * cand * (4 * itemsize + 16) <= budget_bytes:
                th = cand
        if th is None:
            th = 128
        if th < hw:
            return ("tiled", gb, th)
    # TODO(synk): hw not divisible by 128 -> no clean spatial tiling; run the
    # fused path with the smallest legal block and rely on vmem_limit.
    return ("fused", gb, hw)


def _pack_params(cweight, cbias, sweight, sbias, gn_weight, gn_bias, c_half, gb):
    """(rows, 8) per-row parameter table; the per-group pattern tiled gb times."""
    f32 = jnp.float32
    zeros = jnp.zeros((c_half,), f32)
    ones = jnp.ones((c_half,), f32)
    pad = jnp.zeros((2 * c_half,), f32)
    cols = [
        jnp.concatenate([cweight.reshape(-1).astype(f32), zeros]),   # cw
        jnp.concatenate([cbias.reshape(-1).astype(f32), zeros]),     # cb
        jnp.concatenate([zeros, sweight.reshape(-1).astype(f32)]),   # sw
        jnp.concatenate([zeros, sbias.reshape(-1).astype(f32)]),     # sb
        jnp.concatenate([ones, gn_weight.reshape(-1).astype(f32)]),  # gn weight
        jnp.concatenate([zeros, gn_bias.reshape(-1).astype(f32)]),   # gn bias
        pad, pad,
    ]
    params = jnp.stack(cols, axis=1)          # (c_g, 8)
    return jnp.tile(params, (gb, 1))          # (rows, 8)


# --------------------------------------------------------------------------
# Wrapper
# --------------------------------------------------------------------------
def shuffle_attention(x, cweight, cbias, sweight, sbias, gn_weight, gn_bias,
                      G=8, block_budget_bytes=None):
    """x: (b, c, h, w), NCHW, float32 or bfloat16 (math runs in f32 in-kernel)."""
    b, c, h, w = x.shape
    assert c % (2 * G) == 0, "channels must be divisible by 2*G"
    assert G % 2 == 0, "G must be even to fuse channel_shuffle into the kernel"
    c_g = c // G                 # channels per shuffle group
    c_half = c_g // 2            # channels per attention branch
    ch2 = c // 2
    hw = h * w
    itemsize = x.dtype.itemsize

    cap = _vmem_capacity_bytes()
    vmem_limit = min(cap * 3 // 4, 96 * 1024 * 1024)   # 48 MiB on v7x, 96 MiB on v5e/v6e
    budget = block_budget_bytes if block_budget_bytes is not None else cap // 3

    mode, gb, th = _plan_blocks(b, G, c_g, hw, itemsize, budget)
    rows = gb * c_g
    n_gp = (G // 2) // gb

    params = _pack_params(cweight, cbias, sweight, sbias, gn_weight, gn_bias,
                          c_half, gb)

    # Free view: dim 1 splits channels into the two shuffle halves (groups
    # [0, G/2) and [G/2, G)); pairing them per grid step fuses the shuffle.
    x4 = x.reshape(b, 2, ch2, hw)

    if mode == "fused":
        out = pl.pallas_call(
            _fused_kernel,
            out_shape=jax.ShapeDtypeStruct((b, ch2, 2 * hw), x.dtype),
            grid_spec=pltpu.PrefetchScalarGridSpec(
                num_scalar_prefetch=0,
                grid=(b, n_gp),
                in_specs=[
                    pl.BlockSpec((rows, 8), lambda bi, gp: (0, 0)),
                    pl.BlockSpec((None, None, rows, hw),
                                 lambda bi, gp: (bi, 0, gp, 0)),
                    pl.BlockSpec((None, None, rows, hw),
                                 lambda bi, gp: (bi, 1, gp, 0)),
                ],
                out_specs=pl.BlockSpec((None, rows, 2 * hw),
                                       lambda bi, gp: (bi, gp, 0)),
            ),
            compiler_params=pltpu.CompilerParams(
                dimension_semantics=("parallel", "parallel"),
                vmem_limit_bytes=vmem_limit),
        )(params, x4, x4)
    else:
        # Spatially-tiled two-pass fallback (large hw that doesn't fit VMEM).
        n_hw = hw // th

        # Pass 1: per-channel gate scale/bias.
        stats = pl.pallas_call(
            functools.partial(_stats_kernel, inv_hw=1.0 / hw),
            out_shape=jax.ShapeDtypeStruct((b, 2, ch2, 2), jnp.float32),
            grid_spec=pltpu.PrefetchScalarGridSpec(
                num_scalar_prefetch=0,
                grid=(b, 2, n_gp, n_hw),
                in_specs=[
                    pl.BlockSpec((rows, 8), lambda bi, p, gp, t: (0, 0)),
                    pl.BlockSpec((None, None, rows, th),
                                 lambda bi, p, gp, t: (bi, p, gp, t)),
                ],
                out_specs=pl.BlockSpec((None, None, rows, 2),
                                       lambda bi, p, gp, t: (bi, p, gp, 0)),
                scratch_shapes=[pltpu.VMEM((rows, 1), jnp.float32),
                                pltpu.VMEM((rows, 1), jnp.float32)],
            ),
            compiler_params=pltpu.CompilerParams(
                dimension_semantics=("parallel", "parallel", "parallel",
                                     "arbitrary"),
                vmem_limit_bytes=vmem_limit),
        )(params, x4)

        # Pass 2: apply the gate tile by tile, writing the shuffled output.
        out = pl.pallas_call(
            _apply_kernel,
            out_shape=jax.ShapeDtypeStruct((b, ch2, 2 * hw), x.dtype),
            grid_spec=pltpu.PrefetchScalarGridSpec(
                num_scalar_prefetch=0,
                grid=(b, 2, n_gp, n_hw),
                in_specs=[
                    pl.BlockSpec((None, None, rows, 2),
                                 lambda bi, p, gp, t: (bi, p, gp, 0)),
                    pl.BlockSpec((None, None, rows, th),
                                 lambda bi, p, gp, t: (bi, p, gp, t)),
                ],
                out_specs=pl.BlockSpec((None, rows, th),
                                       lambda bi, p, gp, t: (bi, gp, p * n_hw + t)),
            ),
            compiler_params=pltpu.CompilerParams(
                dimension_semantics=("parallel",) * 4,
                vmem_limit_bytes=vmem_limit),
        )(stats, x4)

    # (b, c//2, 2*hw) -> (b, c, h, w) is a free view: the channel shuffle already
    # happened inside the kernel via the paired output layout.
    return out.reshape(b, c, h, w)


# --------------------------------------------------------------------------
# Pure-JAX reference (mirrors the PyTorch forward exactly)
# --------------------------------------------------------------------------
def shuffle_attention_ref(x, cweight, cbias, sweight, sbias, gn_weight, gn_bias, G=8):
    b, c, h, w = x.shape
    c_half = c // (2 * G)
    xg = x.reshape(b * G, c // G, h, w)
    x0, x1 = xg[:, :c_half], xg[:, c_half:]

    cw = cweight.reshape(1, c_half, 1, 1)
    cb = cbias.reshape(1, c_half, 1, 1)
    sw = sweight.reshape(1, c_half, 1, 1)
    sb = sbias.reshape(1, c_half, 1, 1)
    gw = gn_weight.reshape(1, c_half, 1, 1)
    gb = gn_bias.reshape(1, c_half, 1, 1)

    pooled = jnp.mean(x0, axis=(2, 3), keepdims=True)
    x_channel = x0 * jax.nn.sigmoid(cw * pooled + cb)

    mean = jnp.mean(x1, axis=(2, 3), keepdims=True)
    var = jnp.mean((x1 - mean) ** 2, axis=(2, 3), keepdims=True)
    gn = gw * ((x1 - mean) / jnp.sqrt(var + GN_EPS)) + gb
    x_spatial = x1 * jax.nn.sigmoid(sw * gn + sb)

    out = jnp.concatenate([x_channel, x_spatial], axis=1).reshape(b, c, h, w)
    out = out.reshape(b, 2, c // 2, h, w).transpose(0, 2, 1, 3, 4).reshape(b, c, h, w)
    return out


if __name__ == "__main__":
    b, c, h, w = 2, 32, 16, 16
    G = 8
    c_half = c // (2 * G)

    key = jax.random.PRNGKey(0)
    kx, k1, k2, k3, k4, k5, k6 = jax.random.split(key, 7)
    x = jax.random.normal(kx, (b, c, h, w), dtype=jnp.float32)

    cweight = 0.1 * jax.random.normal(k1, (c_half,), dtype=jnp.float32)
    cbias = 1.0 + 0.1 * jax.random.normal(k2, (c_half,), dtype=jnp.float32)
    sweight = 0.1 * jax.random.normal(k3, (c_half,), dtype=jnp.float32)
    sbias = 1.0 + 0.1 * jax.random.normal(k4, (c_half,), dtype=jnp.float32)
    gn_w = 1.0 + 0.1 * jax.random.normal(k5, (c_half,), dtype=jnp.float32)
    gn_b = 0.1 * jax.random.normal(k6, (c_half,), dtype=jnp.float32)

    ref = shuffle_attention_ref(x, cweight, cbias, sweight, sbias, gn_w, gn_b, G=G)

    # 1) fused single-pass path (full-hw blocks, lane-dense shuffled output)
    out = jax.block_until_ready(
        shuffle_attention(x, cweight, cbias, sweight, sbias, gn_w, gn_b, G=G))
    assert out.shape == (b, c, h, w)
    assert jnp.allclose(out, ref, atol=5e-5, rtol=5e-5), "fused path mismatch"

    # 2) spatially-tiled two-pass fallback (forced via a tiny block budget)
    out_t = jax.block_until_ready(
        shuffle_attention(x, cweight, cbias, sweight, sbias, gn_w, gn_b, G=G,
                          block_budget_bytes=1))
    assert jnp.allclose(out_t, ref, atol=5e-5, rtol=5e-5), "tiled path mismatch"

    # 3) bf16 activations (I/O); stats/gate math still runs in f32 in-kernel
    x_bf16 = x.astype(jnp.bfloat16)
    out_bf16 = jax.block_until_ready(
        shuffle_attention(x_bf16, cweight, cbias, sweight, sbias, gn_w, gn_b, G=G))
    ref_bf16 = shuffle_attention_ref(x_bf16.astype(jnp.float32),
                                     cweight, cbias, sweight, sbias, gn_w, gn_b, G=G)
    assert out_bf16.dtype == jnp.bfloat16
    assert jnp.allclose(out_bf16.astype(jnp.float32), ref_bf16,
                        atol=0.05, rtol=0.05), "bf16 path mismatch"

    print("KERNEL_OK")
</pallas_src>

<mosaic_0001>
module attributes {stable_mosaic.version = 11 : i64} {
  func.func @_fused_kernel(%arg0: i32, %arg1: i32, %arg2: memref<16x8xf32, #tpu.memory_space<vmem>>, %arg3: memref<1x1x16x256xf32, #tpu.memory_space<vmem>>, %arg4: memref<1x1x16x256xf32, #tpu.memory_space<vmem>>, %arg5: memref<1x16x512xf32, #tpu.memory_space<vmem>>) attributes {dimension_semantics = [#tpu.dimension_semantics<parallel>, #tpu.dimension_semantics<parallel>], iteration_bounds = array<i64: 2, 1>, scalar_prefetch = 0 : i64, scratch_operands = 0 : i64, tpu.core_type = #tpu.core_type<tc>, window_params = [{pipeline_mode = #tpu.pipeline_mode<synchronous>, transform_indices = @transform_0, window_bounds = array<i64: 16, 8>}, {transform_indices = @transform_1, window_bounds = array<i64: 1, 1, 16, 256>}, {transform_indices = @transform_2, window_bounds = array<i64: 1, 1, 16, 256>}, {transform_indices = @transform_3, window_bounds = array<i64: 1, 16, 512>}]} {
    %c0 = arith.constant 0 : index
    %c0_0 = arith.constant 0 : index
    %0 = vector.load %arg2[%c0, %c0_0] : memref<16x8xf32, #tpu.memory_space<vmem>>, vector<16x8xf32>
    %1 = vector.extract_strided_slice %0 {offsets = [0, 0], sizes = [16, 1], strides = [1, 1]} : vector<16x8xf32> to vector<16x1xf32>
    %2 = vector.extract_strided_slice %0 {offsets = [0, 1], sizes = [16, 1], strides = [1, 1]} : vector<16x8xf32> to vector<16x1xf32>
    %3 = vector.extract_strided_slice %0 {offsets = [0, 2], sizes = [16, 1], strides = [1, 1]} : vector<16x8xf32> to vector<16x1xf32>
    %4 = vector.extract_strided_slice %0 {offsets = [0, 3], sizes = [16, 1], strides = [1, 1]} : vector<16x8xf32> to vector<16x1xf32>
    %5 = vector.extract_strided_slice %0 {offsets = [0, 4], sizes = [16, 1], strides = [1, 1]} : vector<16x8xf32> to vector<16x1xf32>
    %6 = vector.extract_strided_slice %0 {offsets = [0, 5], sizes = [16, 1], strides = [1, 1]} : vector<16x8xf32> to vector<16x1xf32>
    %c0_1 = arith.constant 0 : index
    %c0_2 = arith.constant 0 : index
    %c0_3 = arith.constant 0 : index
    %c0_4 = arith.constant 0 : index
    %7 = vector.load %arg3[%c0_1, %c0_2, %c0_3, %c0_4] : memref<1x1x16x256xf32, #tpu.memory_space<vmem>>, vector<1x1x16x256xf32>
    %8 = vector.shape_cast %7 : vector<1x1x16x256xf32> to vector<16x256xf32>
    %cst = arith.constant dense<0.000000e+00> : vector<16xf32>
    %9 = vector.multi_reduction <add>, %8, %cst [1] : vector<16x256xf32> to vector<16xf32>
    %10 = vector.shape_cast %9 : vector<16xf32> to vector<16x1xf32>
    %11 = arith.mulf %8, %8 : vector<16x256xf32>
    %cst_5 = arith.constant dense<0.000000e+00> : vector<16xf32>
    %12 = vector.multi_reduction <add>, %11, %cst_5 [1] : vector<16x256xf32> to vector<16xf32>
    %13 = vector.shape_cast %12 : vector<16xf32> to vector<16x1xf32>
    %cst_6 = arith.constant 3.906250e-03 : f32
    %14 = vector.broadcast %cst_6 : f32 to vector<16x1xf32>
    %15 = arith.mulf %10, %14 : vector<16x1xf32>
    %cst_7 = arith.constant 3.906250e-03 : f32
    %16 = vector.broadcast %cst_7 : f32 to vector<16x1xf32>
    %17 = arith.mulf %13, %16 : vector<16x1xf32>
    %18 = arith.mulf %15, %15 : vector<16x1xf32>
    %19 = arith.subf %17, %18 : vector<16x1xf32>
    %cst_8 = arith.constant 0.000000e+00 : f32
    %20 = vector.broadcast %cst_8 : f32 to vector<16x1xf32>
    %21 = arith.maximumf %19, %20 : vector<16x1xf32>
    %cst_9 = arith.constant 9.99999974E-6 : f32
    %22 = vector.broadcast %cst_9 : f32 to vector<16x1xf32>
    %23 = arith.addf %21, %22 : vector<16x1xf32>
    %24 = math.rsqrt %23 : vector<16x1xf32>
    %25 = arith.mulf %3, %5 : vector<16x1xf32>
    %26 = arith.mulf %25, %24 : vector<16x1xf32>
    %27 = arith.mulf %3, %6 : vector<16x1xf32>
    %28 = arith.addf %27, %4 : vector<16x1xf32>
    %29 = arith.mulf %1, %15 : vector<16x1xf32>
    %30 = arith.addf %28, %29 : vector<16x1xf32>
    %31 = arith.addf %30, %2 : vector<16x1xf32>
    %32 = arith.mulf %26, %15 : vector<16x1xf32>
    %33 = arith.subf %31, %32 : vector<16x1xf32>
    %34 = vector.broadcast %26 : vector<16x1xf32> to vector<16x256xf32>
    %35 = arith.mulf %34, %8 : vector<16x256xf32>
    %36 = vector.broadcast %33 : vector<16x1xf32> to vector<16x256xf32>
    %37 = arith.addf %35, %36 : vector<16x256xf32>
    %cst_10 = arith.constant 5.000000e-01 : f32
    %38 = vector.broadcast %cst_10 : f32 to vector<16x256xf32>
    %39 = arith.mulf %38, %37 : vector<16x256xf32>
    %40 = math.tanh %39 : vector<16x256xf32>
    %cst_11 = arith.constant 5.000000e-01 : f32
    %41 = vector.broadcast %cst_11 : f32 to vector<16x256xf32>
    %42 = arith.mulf %41, %40 : vector<16x256xf32>
    %cst_12 = arith.constant 5.000000e-01 : f32
    %43 = vector.broadcast %cst_12 : f32 to vector<16x256xf32>
    %44 = arith.addf %42, %43 : vector<16x256xf32>
    %45 = arith.mulf %8, %44 : vector<16x256xf32>
    %c0_13 = arith.constant 0 : index
    %c0_14 = arith.constant 0 : index
    %c0_15 = arith.constant 0 : index
    %46 = vector.load %arg5[%c0_13, %c0_14, %c0_15] : memref<1x16x512xf32, #tpu.memory_space<vmem>>, vector<1x16x256xf32>
    %47 = vector.shape_cast %46 : vector<1x16x256xf32> to vector<16x256xf32>
    %48 = vector.shape_cast %45 : vector<16x256xf32> to vector<1x16x256xf32>
    tpu.vector_store %arg5[%c0_13, %c0_14, %c0_15], %48 {strides = array<i32>} : memref<1x16x512xf32, #tpu.memory_space<vmem>>, vector<1x16x256xf32>,
    %c0_16 = arith.constant 0 : index
    %c0_17 = arith.constant 0 : index
    %c0_18 = arith.constant 0 : index
    %c0_19 = arith.constant 0 : index
    %49 = vector.load %arg4[%c0_16, %c0_17, %c0_18, %c0_19] : memref<1x1x16x256xf32, #tpu.memory_space<vmem>>, vector<1x1x16x256xf32>
    %50 = vector.shape_cast %49 : vector<1x1x16x256xf32> to vector<16x256xf32>
    %cst_20 = arith.constant dense<0.000000e+00> : vector<16xf32>
    %51 = vector.multi_reduction <add>, %50, %cst_20 [1] : vector<16x256xf32> to vector<16xf32>
    %52 = vector.shape_cast %51 : vector<16xf32> to vector<16x1xf32>
    %53 = arith.mulf %50, %50 : vector<16x256xf32>
    %cst_21 = arith.constant dense<0.000000e+00> : vector<16xf32>
    %54 = vector.multi_reduction <add>, %53, %cst_21 [1] : vector<16x256xf32> to vector<16xf32>
    %55 = vector.shape_cast %54 : vector<16xf32> to vector<16x1xf32>
    %cst_22 = arith.constant 3.906250e-03 : f32
    %56 = vector.broadcast %cst_22 : f32 to vector<16x1xf32>
    %57 = arith.mulf %52, %56 : vector<16x1xf32>
    %cst_23 = arith.constant 3.906250e-03 : f32
    %58 = vector.broadcast %cst_23 : f32 to vector<16x1xf32>
    %59 = arith.mulf %55, %58 : vector<16x1xf32>
    %60 = arith.mulf %57, %57 : vector<16x1xf32>
    %61 = arith.subf %59, %60 : vector<16x1xf32>
    %cst_24 = arith.constant 0.000000e+00 : f32
    %62 = vector.broadcast %cst_24 : f32 to vector<16x1xf32>
    %63 = arith.maximumf %61, %62 : vector<16x1xf32>
    %cst_25 = arith.constant 9.99999974E-6 : f32
    %64 = vector.broadcast %cst_25 : f32 to vector<16x1xf32>
    %65 = arith.addf %63, %64 : vector<16x1xf32>
    %66 = math.rsqrt %65 : vector<16x1xf32>
    %67 = arith.mulf %3, %5 : vector<16x1xf32>
    %68 = arith.mulf %67, %66 : vector<16x1xf32>
    %69 = arith.mulf %3, %6 : vector<16x1xf32>
    %70 = arith.addf %69, %4 : vector<16x1xf32>
    %71 = arith.mulf %1, %57 : vector<16x1xf32>
    %72 = arith.addf %70, %71 : vector<16x1xf32>
    %73 = arith.addf %72, %2 : vector<16x1xf32>
    %74 = arith.mulf %68, %57 : vector<16x1xf32>
    %75 = arith.subf %73, %74 : vector<16x1xf32>
    %76 = vector.broadcast %68 : vector<16x1xf32> to vector<16x256xf32>
    %77 = arith.mulf %76, %50 : vector<16x256xf32>
    %78 = vector.broadcast %75 : vector<16x1xf32> to vector<16x256xf32>
    %79 = arith.addf %77, %78 : vector<16x256xf32>
    %cst_26 = arith.constant 5.000000e-01 : f32
    %80 = vector.broadcast %cst_26 : f32 to vector<16x256xf32>
    %81 = arith.mulf %80, %79 : vector<16x256xf32>
    %82 = math.tanh %81 : vector<16x256xf32>
    %cst_27 = arith.constant 5.000000e-01 : f32
    %83 = vector.broadcast %cst_27 : f32 to vector<16x256xf32>
    %84 = arith.mulf %83, %82 : vector<16x256xf32>
    %cst_28 = arith.constant 5.000000e-01 : f32
    %85 = vector.broadcast %cst_28 : f32 to vector<16x256xf32>
    %86 = arith.addf %84, %85 : vector<16x256xf32>
    %87 = arith.mulf %50, %86 : vector<16x256xf32>
    %c0_29 = arith.constant 0 : index
    %c0_30 = arith.constant 0 : index
    %c256 = arith.constant 256 : index
    %88 = vector.load %arg5[%c0_29, %c0_30, %c256] : memref<1x16x512xf32, #tpu.memory_space<vmem>>, vector<1x16x256xf32>
    %89 = vector.shape_cast %88 : vector<1x16x256xf32> to vector<16x256xf32>
    %90 = vector.shape_cast %87 : vector<16x256xf32> to vector<1x16x256xf32>
    tpu.vector_store %arg5[%c0_29, %c0_30, %c256], %90 {strides = array<i32>} : memref<1x16x512xf32, #tpu.memory_space<vmem>>, vector<1x16x256xf32>,
    return
  }
  func.func @transform_0(%arg0: i32, %arg1: i32) -> (i32, i32) {
    %c0_i32 = arith.constant 0 : i32
    %c0_i32_0 = arith.constant 0 : i32
    %c0_i32_1 = arith.constant 0 : i32
    return %c0_i32, %c0_i32_0 : i32, i32
  }
  func.func @transform_1(%arg0: i32, %arg1: i32) -> (i32, i32, i32, i32) {
    %c0_i32 = arith.constant 0 : i32
    %c0_i32_0 = arith.constant 0 : i32
    %c0_i32_1 = arith.constant 0 : i32
    return %arg0, %c0_i32, %arg1, %c0_i32_0 : i32, i32, i32, i32
  }
  func.func @transform_2(%arg0: i32, %arg1: i32) -> (i32, i32, i32, i32) {
    %c1_i32 = arith.constant 1 : i32
    %c0_i32 = arith.constant 0 : i32
    %c0_i32_0 = arith.constant 0 : i32
    return %arg0, %c1_i32, %arg1, %c0_i32 : i32, i32, i32, i32
  }
  func.func @transform_3(%arg0: i32, %arg1: i32) -> (i32, i32, i32) {
    %c0_i32 = arith.constant 0 : i32
    %c0_i32_0 = arith.constant 0 : i32
    return %arg0, %arg1, %c0_i32 : i32, i32, i32
  }
}

</mosaic_0001>

<llo_original>
// kernel: tpu_custom_call.1
$region0: #{tpu_custom_call.1}
  #allocation0 [shape = 'u32[]', space=smem, size = 0x4, offset = 0x4, fixed_abs, tag = 'smem constant byte address 0x4 - core index']
  #allocation1 [shape = 'u32[144,128]{1,0:T(1,128)}', space=vmem, size = 0x12000, scoped, tag = 'internal scratch']
  %s0 = inlined_call_operand.vmem [shape: f32[16,8], index: 0, kind: input, shape index: {}]
  %s1 = inlined_call_operand.hbm [shape: f32[2,2,16,256], index: 1, kind: input, shape index: {}]
  %s2 = inlined_call_operand.hbm [shape: f32[2,2,16,256], index: 2, kind: input, shape index: {}]
  %s3 = inlined_call_operand.hbm [shape: f32[2,16,512], index: 3, kind: output, shape index: {}]
  %s4 = sld [smem:[#allocation0]]
  $region53: #{tpu_custom_call.1} parent=0
    _
  %s6 = ssub.s32 1, %s4
  %s7 = scalar_select 0, %s6, %s4
  $region1: #{tpu_custom_call.1} parent=0
    #allocation2 [shape = 'u8[32768]{0}', space=vmem, size = 0x8000, scoped, tag = 'input window, operand 1']
    #allocation3 [shape = 's32[2]{0}', space=sflag, size = 0x8, scoped, tag = 'scoped memory for tpu_custom_call.1']
    #allocation4 [shape = 's32[2]{0}', space=sflag, size = 0x8, scoped, tag = 'scoped memory for tpu_custom_call.1']
    #allocation5 [shape = 'u8[32768]{0}', space=vmem, size = 0x8000, scoped, tag = 'input window, operand 2']
    #allocation6 [shape = 's32[2]{0}', space=sflag, size = 0x8, scoped, tag = 'scoped memory for tpu_custom_call.1']
    #allocation7 [shape = 'u8[65536]{0}', space=vmem, size = 0x10000, scoped, tag = 'output window, operand 0']
    %8 = vsyncpa [#allocation3], 0
    %s9 = scalar_lea.sflag [#allocation3], 1
    %10 = vsyncpa %s9, 0
    %11 = vsyncpa [#allocation6], 0
    %s12 = scalar_lea.sflag [#allocation6], 1
    %13 = vsyncpa %s12, 0
    %14 = vsyncpa [#allocation4], 0
    %s15 = scalar_lea.sflag [#allocation4], 1
    %16 = vsyncpa %s15, 0
    loop: start=0, step=1, limit=4
    $region2: #{tpu_custom_call.1} parent=1 // loop_pre_header
      _
    $region3: #{tpu_custom_call.1} parent=1 // loop_header
      %s18 = sphi 0, %s22
      %p19 = scmp.ge.s32.totalorder %s18, 4
      %s25 = sphi 0, %s37
      %s26 = sphi 0, %s33
      %s27 = sphi 0, %s25
      %s28 = sphi 0, %s26
      %s29 = sphi 0, %s27
      %s30 = sphi 0, %s28
      %s38 = sphi 0, %s38
      %s40 = sphi 0, %s38
      %s41 = sphi 0, %s40
      %s55 = sphi 0, %s41
      %s63 = sphi 0, %s65
      %s66 = sphi 0, %s63
      %s67 = sphi 0, %s66
      %s83 = sphi 0, %s67
      %s91 = sphi 0, %s93
      %s94 = sphi 0, %s91
      %s95 = sphi 0, %s94
      %s111 = sphi 0, %s95
      %s119 = sphi 0, %s121
      %s122 = sphi 0, %s119
      %s123 = sphi 0, %s122
      %s139 = sphi 0, %s123
    $region4: #{tpu_custom_call.1} parent=1 // loop_header_branch
      %21 = sbr.rel (%p19) target = $region8
    $region5: #{tpu_custom_call.1} parent=1 // loop_body
      %s23 = ssub.s32 %s18, 1
      %s24 = ssub.s32 %s18, 2
      %s31 = sadd.s32 1, %s26
      %p32 = scmp.ge.s32.totalorder %s31, 1
      %s33 = scalar_select %p32, 0, %s31
      %s34 = sadd.s32 1, %s25
      %s35 = scalar_select %p32, %s34, %s25
      %p36 = scmp.ge.s32.totalorder %s35, 2
      %s37 = scalar_select %p36, 0, %s35
      %s39 = sadd.s32 %s38, 1
      %p42 = scmp.eq.s32.totalorder %s18, 1
      %p43 = scmp.ne.s32.totalorder %s38, %s40
      %p44 = scmp.eq.s32.totalorder %s18, 0
      %p45 = por %p43, %p44
      %p46 = scmp.ne.s32.totalorder %s38, %s40
      %p47 = scmp.eq.s32.totalorder %s23, 1
      %p48 = por %p46, %p47
      %p49 = scmp.ne.s32.totalorder %s40, %s41
      %p50 = scmp.eq.s32.totalorder %s23, 0
      %p51 = por %p49, %p50
      %p52 = scmp.ne.s32.totalorder %s40, %s41
      %p53 = scmp.eq.s32.totalorder %s24, 1
      %p54 = por %p52, %p53
      %p56 = scmp.ne.s32.totalorder %s41, %s55
      %p57 = scmp.eq.s32.totalorder %s24, 0
      %p58 = por %p56, %p57
      %s59 = ssub.s32 %s25, %s37
      %s60 = ssub.s32 %s26, %s33
      %s61 = sor.u32 %s59, %s60
      %p62 = scmp.eq.s32.totalorder %s61, 0
      %s64 = sadd.s32 %s63, 1
      %s65 = scalar_select %p62, %s63, %s64
      %p68 = pneg %p62
      %p69 = scmp.eq.s32.totalorder %s18, 1
      %p70 = por %p68, %p69
      %p71 = scmp.ne.s32.totalorder %s63, %s66
      %p72 = scmp.eq.s32.totalorder %s18, 0
      %p73 = por %p71, %p72
      %p74 = scmp.ne.s32.totalorder %s63, %s66
      %p75 = scmp.eq.s32.totalorder %s23, 1
      %p76 = por %p74, %p75
      %p77 = scmp.ne.s32.totalorder %s66, %s67
      %p78 = scmp.eq.s32.totalorder %s23, 0
      %p79 = por %p77, %p78
      %p80 = scmp.ne.s32.totalorder %s66, %s67
      %p81 = scmp.eq.s32.totalorder %s24, 1
      %p82 = por %p80, %p81
      %p84 = scmp.ne.s32.totalorder %s67, %s83
      %p85 = scmp.eq.s32.totalorder %s24, 0
      %p86 = por %p84, %p85
      %s87 = ssub.s32 %s25, %s37
      %s88 = ssub.s32 %s26, %s33
      %s89 = sor.u32 %s87, %s88
      %p90 = scmp.eq.s32.totalorder %s89, 0
      %s92 = sadd.s32 %s91, 1
      %s93 = scalar_select %p90, %s91, %s92
      %p96 = pneg %p90
      %p97 = scmp.eq.s32.totalorder %s18, 1
      %p98 = por %p96, %p97
      %p99 = scmp.ne.s32.totalorder %s91, %s94
      %p100 = scmp.eq.s32.totalorder %s18, 0
      %p101 = por %p99, %p100
      %p102 = scmp.ne.s32.totalorder %s91, %s94
      %p103 = scmp.eq.s32.totalorder %s23, 1
      %p104 = por %p102, %p103
      %p105 = scmp.ne.s32.totalorder %s94, %s95
      %p106 = scmp.eq.s32.totalorder %s23, 0
      %p107 = por %p105, %p106
      %p108 = scmp.ne.s32.totalorder %s94, %s95
      %p109 = scmp.eq.s32.totalorder %s24, 1
      %p110 = por %p108, %p109
      %p112 = scmp.ne.s32.totalorder %s95, %s111
      %p113 = scmp.eq.s32.totalorder %s24, 0
      %p114 = por %p112, %p113
      %s115 = ssub.s32 %s25, %s37
      %s116 = ssub.s32 %s26, %s33
      %s117 = sor.u32 %s115, %s116
      %p118 = scmp.eq.s32.totalorder %s117, 0
      %s120 = sadd.s32 %s119, 1
      %s121 = scalar_select %p118, %s119, %s120
      %p124 = pneg %p118
      %p125 = scmp.eq.s32.totalorder %s18, 1
      %p126 = por %p124, %p125
      %p127 = scmp.ne.s32.totalorder %s119, %s122
      %p128 = scmp.eq.s32.totalorder %s18, 0
      %p129 = por %p127, %p128
      %p130 = scmp.ne.s32.totalorder %s119, %s122
      %p131 = scmp.eq.s32.totalorder %s23, 1
      %p132 = por %p130, %p131
      %p133 = scmp.ne.s32.totalorder %s122, %s123
      %p134 = scmp.eq.s32.totalorder %s23, 0
      %p135 = por %p133, %p134
      %p136 = scmp.ne.s32.totalorder %s122, %s123
      %p137 = scmp.eq.s32.totalorder %s24, 1
      %p138 = por %p136, %p137
      %p140 = scmp.ne.s32.totalorder %s123, %s139
      %p141 = scmp.eq.s32.totalorder %s24, 0
      %p142 = por %p140, %p141
      %p143 = scmp.le.s32.totalorder 1, %s18
      %p144 = scmp.lt.s32.totalorder %s18, 3
      %p145 = pnand %p143, %p144
      %p146 = pneg %p145
      // Predicated region
      $region9: #{tpu_custom_call.1} parent=5 // pred_check
        _
      $region10: #{tpu_custom_call.1} parent=5 // pred_check_branch
        %148 = sbr.rel (%p145) target = $region12
      $region11: #{tpu_custom_call.1} parent=5 // pred_region
        %s149 = ssub.s32 %s18, 1
        // Predicated region
        $region13: #{tpu_custom_call.1} parent=11 // pred_check
          %p150 = pneg %p51
        $region14: #{tpu_custom_call.1} parent=11 // pred_check_branch
          %152 = sbr.rel (%p150) target = $region16
        $region15: #{tpu_custom_call.1} parent=11 // pred_region
          _
        $region16: #{tpu_custom_call.1} parent=11 // pred_fallthru
          _
      $region12: #{tpu_custom_call.1} parent=5 // pred_fallthru
        _
      %p153 = scmp.lt.s32.totalorder %s18, 2
      // Predicated region
      $region17: #{tpu_custom_call.1} parent=5 // pred_check
        %p154 = pneg %p153
      $region18: #{tpu_custom_call.1} parent=5 // pred_check_branch
        %156 = sbr.rel (%p154) target = $region20
      $region19: #{tpu_custom_call.1} parent=5 // pred_region
        // Predicated region
        $region21: #{tpu_custom_call.1} parent=19 // pred_check
          %p157 = pneg %p73
        $region22: #{tpu_custom_call.1} parent=19 // pred_check_branch
          %159 = sbr.rel (%p157) target = $region24
        $region23: #{tpu_custom_call.1} parent=19 // pred_region
          %s160 = sand.u32 %s63, 1
          %s161 = scalar_lea.sflag [#allocation3], %s160
          %s162 = sand.u32 %s63, 1
          %s163 = smul.addr %s162, 32
          %s164 = scalar_lea.vmem [#allocation2], %s163
          %s165 = smul.u32 2, %s26
          %s167 = ssub.s32 512, 512
          %168 = vsyncadd %s161, %s167
          %s169 = smul.addr %s165, 2
          %s170 = smul.addr %s25, 8
          %s171 = sadd.s32 %s169, %s170
          %s172 = smul.addr %s171, 128
          %s173 = scalar_lea.hbm %s1, %s172
          %s174 = sshll.u32 %s164, 4
          %s175 = int_to_ptr.vmem [resolvable:$true] %s174
          %180 = dma.hbm_to_vmem [thread:$0]  %s173, 512, %s175, %s161, 256, 256, 16
        $region24: #{tpu_custom_call.1} parent=19 // pred_fallthru
          _
        // Predicated region
        $region25: #{tpu_custom_call.1} parent=19 // pred_check
          %p181 = pneg %p101
        $region26: #{tpu_custom_call.1} parent=19 // pred_check_branch
          %183 = sbr.rel (%p181) target = $region28
        $region27: #{tpu_custom_call.1} parent=19 // pred_region
          %s184 = sand.u32 %s91, 1
          %s185 = scalar_lea.sflag [#allocation6], %s184
          %s186 = sand.u32 %s91, 1
          %s187 = smul.addr %s186, 32
          %s188 = scalar_lea.vmem [#allocation5], %s187
          %s189 = smul.u32 2, %s26
          %s191 = ssub.s32 512, 512
          %192 = vsyncadd %s185, %s191
          %s193 = smul.addr %s189, 2
          %s194 = sadd.s32 %s193, 4
          %s195 = smul.addr %s25, 8
          %s196 = sadd.s32 %s194, %s195
          %s197 = smul.addr %s196, 128
          %s198 = scalar_lea.hbm %s2, %s197
          %s199 = sshll.u32 %s188, 4
          %s200 = int_to_ptr.vmem [resolvable:$true] %s199
          %205 = dma.hbm_to_vmem [thread:$0]  %s198, 512, %s200, %s185, 256, 256, 16
        $region28: #{tpu_custom_call.1} parent=19 // pred_fallthru
          _
      $region20: #{tpu_custom_call.1} parent=5 // pred_fallthru
        _
      %p206 = scmp.le.s32.totalorder 1, %s18
      %p207 = scmp.lt.s32.totalorder %s18, 3
      %p208 = pnand %p206, %p207
      %p209 = pneg %p208
      // Predicated region
      $region29: #{tpu_custom_call.1} parent=5 // pred_check
        _
      $region30: #{tpu_custom_call.1} parent=5 // pred_check_branch
        %211 = sbr.rel (%p208) target = $region32
      $region31: #{tpu_custom_call.1} parent=5 // pred_region
        %s212 = ssub.s32 %s18, 1
        %s213 = sand.u32 %s66, 1
        %s214 = scalar_lea.sflag [#allocation3], %s213
        %s215 = sand.u32 %s66, 1
        %s216 = smul.addr %s215, 32
        %s217 = scalar_lea.vmem [#allocation2], %s216
        // Predicated region
        $region33: #{tpu_custom_call.1} parent=31 // pred_check
          %p218 = pneg %p79
        $region34: #{tpu_custom_call.1} parent=31 // pred_check_branch
          %220 = sbr.rel (%p218) target = $region36
        $region35: #{tpu_custom_call.1} parent=31 // pred_region
          %221 = dma.done %s214, 512
        $region36: #{tpu_custom_call.1} parent=31 // pred_fallthru
          _
        %s222 = sand.u32 %s94, 1
        %s223 = scalar_lea.sflag [#allocation6], %s222
        %s224 = sand.u32 %s94, 1
        %s225 = smul.addr %s224, 32
        %s226 = scalar_lea.vmem [#allocation5], %s225
        // Predicated region
        $region37: #{tpu_custom_call.1} parent=31 // pred_check
          %p227 = pneg %p107
        $region38: #{tpu_custom_call.1} parent=31 // pred_check_branch
          %229 = sbr.rel (%p227) target = $region40
        $region39: #{tpu_custom_call.1} parent=31 // pred_region
          %230 = dma.done %s223, 512
        $region40: #{tpu_custom_call.1} parent=31 // pred_fallthru
          _
        %p231 = pneg %p51
        %p232 = pneg %p48
        %s233 = sand.u32 %s66, 1
        %s234 = scalar_lea.sflag [#allocation3], %s233
        %s235 = sand.u32 %s66, 1
        %s236 = smul.addr %s235, 32
        %s237 = scalar_lea.vmem [#allocation2], %s236
        %p238 = pneg %p79
        %p239 = pneg %p76
        %s240 = sand.u32 %s94, 1
        %s241 = scalar_lea.sflag [#allocation6], %s240
        %s242 = sand.u32 %s94, 1
        %s243 = smul.addr %s242, 32
        %s244 = scalar_lea.vmem [#allocation5], %s243
        %p245 = pneg %p107
        %p246 = pneg %p104
        %p247 = pneg %p135
        %p248 = pneg %p132
        %s249 = sand.u32 %s122, 1
        %s250 = scalar_lea.sflag [#allocation4], %s249
        %s251 = sand.u32 %s122, 1
        %s252 = smul.addr %s251, 64
        %s253 = scalar_lea.vmem [#allocation7], %s252
        %s254 = smul.u32 2, %s28
        %s255 = smul.u32 2, %s28
        %s256 = smul.u32 2, %s28
        %v257 = vld [vmem:[%s0] sm:$0xff]
        %v258 = vld [vmem:[%s0 + $0x8] sm:$0xff]
        %v259 = vld [vmem:[%s217] sm:$0xff]
        %v260 = vld [vmem:[%s217 + $0x8] sm:$0xff]
        %v261 = vld [vmem:[%s217 + $0x10] sm:$0xff]
        %v262 = vld [vmem:[%s217 + $0x18] sm:$0xff]
        %v263 = vadd.f32 %v259, %v260
        %264 = vadd.xlane.f32.xlu0 %v263
        %v265 = vpop.xlane.xlu0 %264
        %v266 = vadd.f32 %v261, %v262
        %267 = vadd.xlane.f32.xlu0 %v266
        %v268 = vpop.xlane.xlu0 %267
        %v269 = vmul.f32 %v259, %v259
        %v270 = vmul.f32 %v260, %v260
        %v271 = vmul.f32 %v261, %v261
        %v272 = vmul.f32 %v262, %v262
        %v273 = vadd.f32 %v269, %v270
        %274 = vadd.xlane.f32.xlu0 %v273
        %v275 = vpop.xlane.xlu0 %274
        %v276 = vadd.f32 %v271, %v272
        %277 = vadd.xlane.f32.xlu0 %v276
        %v278 = vpop.xlane.xlu0 %277
        %v279 = vmul.f32 %v265, 0.00390625
        %v280 = vmul.f32 %v268, 0.00390625
        %v281 = vmul.f32 %v275, 0.00390625
        %v282 = vmul.f32 %v278, 0.00390625
        %v283 = vmul.f32 %v279, %v279
        %v284 = vmul.f32 %v280, %v280
        %v285 = vsub.f32 %v281, %v283
        %v286 = vsub.f32 %v282, %v284
        %v287 = vmax.f32 %v285, 0.0
        %v288 = vmax.f32 %v286, 0.0
        %v289 = vadd.f32 %v287, 1e-05
        %v290 = vadd.f32 %v288, 1e-05
        %v291 = vrsqrt.pop %v289
        %v292 = vrsqrt.pop %v290
        %295 = vrot.lane.b32.xlu0 %v257, 126
        %v296 = vpop.permute.xlu0 %295
        %297 = vrot.lane.b32.xlu0 %v258, 126
        %v298 = vpop.permute.xlu0 %297
        %v301 = vmul.f32 %v257, %v296
        %v302 = vmul.f32 %v258, %v298
        %v303 = vmul.f32 %v301, %v291
        %v304 = vmul.f32 %v302, %v292
        %305 = vrot.lane.b32.xlu0 %v257, 125
        %v306 = vpop.permute.xlu0 %305
        %307 = vrot.lane.b32.xlu0 %v258, 125
        %v308 = vpop.permute.xlu0 %307
        %v311 = vmul.f32 %v257, %v306
        %v312 = vmul.f32 %v258, %v308
        %313 = vrot.lane.b32.xlu0 %v257, 127
        %v314 = vpop.permute.xlu0 %313
        %315 = vrot.lane.b32.xlu0 %v258, 127
        %v316 = vpop.permute.xlu0 %315
        %v319 = vadd.f32 %v311, %v314
        %v320 = vadd.f32 %v312, %v316
        %v321 = vmul.f32 %v257, %v279
        %v322 = vmul.f32 %v258, %v280
        %325 = vrot.lane.b32.xlu0 %v321, 2
        %v326 = vpop.permute.xlu0 %325
        %327 = vrot.lane.b32.xlu0 %v322, 2
        %v328 = vpop.permute.xlu0 %327
        %v331 = vadd.f32 %v319, %v326
        %v332 = vadd.f32 %v320, %v328
        %333 = vrot.lane.b32.xlu0 %v257, 1
        %v334 = vpop.permute.xlu0 %333
        %335 = vrot.lane.b32.xlu0 %v258, 1
        %v336 = vpop.permute.xlu0 %335
        %v339 = vadd.f32 %v331, %v334
        %v340 = vadd.f32 %v332, %v336
        %v341 = vmul.f32 %v303, %v279
        %v342 = vmul.f32 %v304, %v280
        %v343 = vsub.f32 %v339, %v341
        %v344 = vsub.f32 %v340, %v342
        %346 = vset.pattern.permute.xlu0 2
        %347 = vperm.xlu0 %346, %v303
        %v348 = vpop.permute.xlu0 %347
        %351 = vset.pattern.permute.xlu0 2
        %352 = vperm.xlu0 %351, %v304
        %v353 = vpop.permute.xlu0 %352
        %v355 = vmul.f32 %v348, %v259
        %v356 = vmul.f32 %v348, %v260
        %v357 = vmul.f32 %v353, %v261
        %v358 = vmul.f32 %v353, %v262
        %360 = vset.pattern.permute.xlu0 2
        %361 = vperm.xlu0 %360, %v343
        %v362 = vpop.permute.xlu0 %361
        %365 = vset.pattern.permute.xlu0 2
        %366 = vperm.xlu0 %365, %v344
        %v367 = vpop.permute.xlu0 %366
        %v369 = vadd.f32 %v355, %v362
        %v370 = vadd.f32 %v356, %v362
        %v371 = vadd.f32 %v357, %v367
        %v372 = vadd.f32 %v358, %v367
        %v373 = vmul.f32 %v369, 0.5
        %v374 = vmul.f32 %v370, 0.5
        %v375 = vmul.f32 %v371, 0.5
        %v376 = vmul.f32 %v372, 0.5
        %v377 = vtanh.pop %v373
        %v378 = vtanh.pop %v374
        %v379 = vtanh.pop %v375
        %v380 = vtanh.pop %v376
        %v381 = vmul.f32 %v377, 0.5
        %v382 = vmul.f32 %v378, 0.5
        %v383 = vmul.f32 %v379, 0.5
        %v384 = vmul.f32 %v380, 0.5
        %v385 = vadd.f32 %v381, 0.5
        %v386 = vadd.f32 %v382, 0.5
        %v387 = vadd.f32 %v383, 0.5
        %v388 = vadd.f32 %v384, 0.5
        %v389 = vmul.f32 %v259, %v385
        %v390 = vmul.f32 %v260, %v386
        %v391 = vmul.f32 %v261, %v387
        %v392 = vmul.f32 %v262, %v388
        %393 = vst [vmem:[%s253] sm:$0xff] %v389
        %394 = vst [vmem:[%s253 + $0x8] sm:$0xff] %v390
        %395 = vst [vmem:[%s253 + $0x20] sm:$0xff] %v391
        %396 = vst [vmem:[%s253 + $0x28] sm:$0xff] %v392
        %v397 = vld [vmem:[%s226] sm:$0xff]
        %v398 = vld [vmem:[%s226 + $0x8] sm:$0xff]
        %v399 = vld [vmem:[%s226 + $0x10] sm:$0xff]
        %v400 = vld [vmem:[%s226 + $0x18] sm:$0xff]
        %v401 = vadd.f32 %v397, %v398
        %402 = vadd.xlane.f32.xlu0 %v401
        %v403 = vpop.xlane.xlu0 %402
        %v404 = vadd.f32 %v399, %v400
        %405 = vadd.xlane.f32.xlu0 %v404
        %v406 = vpop.xlane.xlu0 %405
        %v407 = vmul.f32 %v397, %v397
        %v408 = vmul.f32 %v398, %v398
        %v409 = vmul.f32 %v399, %v399
        %v410 = vmul.f32 %v400, %v400
        %v411 = vadd.f32 %v407, %v408
        %412 = vadd.xlane.f32.xlu0 %v411
        %v413 = vpop.xlane.xlu0 %412
        %v414 = vadd.f32 %v409, %v410
        %415 = vadd.xlane.f32.xlu0 %v414
        %v416 = vpop.xlane.xlu0 %415
        %v417 = vmul.f32 %v403, 0.00390625
        %v418 = vmul.f32 %v406, 0.00390625
        %v419 = vmul.f32 %v413, 0.00390625
        %v420 = vmul.f32 %v416, 0.00390625
        %v421 = vmul.f32 %v417, %v417
        %v422 = vmul.f32 %v418, %v418
        %v423 = vsub.f32 %v419, %v421
        %v424 = vsub.f32 %v420, %v422
        %v425 = vmax.f32 %v423, 0.0
        %v426 = vmax.f32 %v424, 0.0
        %v427 = vadd.f32 %v425, 1e-05
        %v428 = vadd.f32 %v426, 1e-05
        %v429 = vrsqrt.pop %v427
        %v430 = vrsqrt.pop %v428
        %v431 = vmul.f32 %v301, %v429
        %v432 = vmul.f32 %v302, %v430
        %v433 = vmul.f32 %v257, %v417
        %v434 = vmul.f32 %v258, %v418
        %437 = vrot.lane.b32.xlu0 %v433, 2
        %v438 = vpop.permute.xlu0 %437
        %439 = vrot.lane.b32.xlu0 %v434, 2
        %v440 = vpop.permute.xlu0 %439
        %v443 = vadd.f32 %v319, %v438
        %v444 = vadd.f32 %v320, %v440
        %v445 = vadd.f32 %v443, %v334
        %v446 = vadd.f32 %v444, %v336
        %v447 = vmul.f32 %v431, %v417
        %v448 = vmul.f32 %v432, %v418
        %v449 = vsub.f32 %v445, %v447
        %v450 = vsub.f32 %v446, %v448
        %452 = vset.pattern.permute.xlu0 2
        %453 = vperm.xlu0 %452, %v431
        %v454 = vpop.permute.xlu0 %453
        %457 = vset.pattern.permute.xlu0 2
        %458 = vperm.xlu0 %457, %v432
        %v459 = vpop.permute.xlu0 %458
        %v461 = vmul.f32 %v454, %v397
        %v462 = vmul.f32 %v454, %v398
        %v463 = vmul.f32 %v459, %v399
        %v464 = vmul.f32 %v459, %v400
        %466 = vset.pattern.permute.xlu0 2
        %467 = vperm.xlu0 %466, %v449
        %v468 = vpop.permute.xlu0 %467
        %471 = vset.pattern.permute.xlu0 2
        %472 = vperm.xlu0 %471, %v450
        %v473 = vpop.permute.xlu0 %472
        %v475 = vadd.f32 %v461, %v468
        %v476 = vadd.f32 %v462, %v468
        %v477 = vadd.f32 %v463, %v473
        %v478 = vadd.f32 %v464, %v473
        %v479 = vmul.f32 %v475, 0.5
        %v480 = vmul.f32 %v476, 0.5
        %v481 = vmul.f32 %v477, 0.5
        %v482 = vmul.f32 %v478, 0.5
        %v483 = vtanh.pop %v479
        %v484 = vtanh.pop %v480
        %v485 = vtanh.pop %v481
        %v486 = vtanh.pop %v482
        %v487 = vmul.f32 %v483, 0.5
        %v488 = vmul.f32 %v484, 0.5
        %v489 = vmul.f32 %v485, 0.5
        %v490 = vmul.f32 %v486, 0.5
        %v491 = vadd.f32 %v487, 0.5
        %v492 = vadd.f32 %v488, 0.5
        %v493 = vadd.f32 %v489, 0.5
        %v494 = vadd.f32 %v490, 0.5
        %v495 = vmul.f32 %v397, %v491
        %v496 = vmul.f32 %v398, %v492
        %v497 = vmul.f32 %v399, %v493
        %v498 = vmul.f32 %v400, %v494
        %499 = vst [vmem:[%s253 + $0x10] sm:$0xff] %v495
        %500 = vst [vmem:[%s253 + $0x18] sm:$0xff] %v496
        %501 = vst [vmem:[%s253 + $0x30] sm:$0xff] %v497
        %502 = vst [vmem:[%s253 + $0x38] sm:$0xff] %v498
        %s503 = sand.u32 %s122, 1
        %s504 = scalar_lea.sflag [#allocation4], %s503
        %s505 = sand.u32 %s122, 1
        %s506 = smul.addr %s505, 64
        %s507 = scalar_lea.vmem [#allocation7], %s506
        // Predicated region
        $region41: #{tpu_custom_call.1} parent=31 // pred_check
          %p508 = pneg %p132
        $region42: #{tpu_custom_call.1} parent=31 // pred_check_branch
          %510 = sbr.rel (%p508) target = $region44
        $region43: #{tpu_custom_call.1} parent=31 // pred_region
          %s511 = smul.u32 2, %s28
          %s513 = ssub.s32 1024, 1024
          %514 = vsyncadd %s504, %s513
          %s515 = smul.addr %s511, 4
          %s516 = smul.addr %s27, 8
          %s517 = sadd.s32 %s515, %s516
          %s518 = smul.addr %s517, 128
          %s519 = scalar_lea.hbm %s3, %s518
          %s520 = sshll.u32 %s507, 4
          %s521 = int_to_ptr.vmem [resolvable:$true] %s520
          %526 = dma.vmem_to_hbm [thread:$0]  %s521, 1024, %s519, %s504, 512, 512, 32
        $region44: #{tpu_custom_call.1} parent=31 // pred_fallthru
          _
      $region32: #{tpu_custom_call.1} parent=5 // pred_fallthru
        _
      %p527 = scmp.le.s32.totalorder 2, %s18
      // Predicated region
      $region45: #{tpu_custom_call.1} parent=5 // pred_check
        %p528 = pneg %p527
      $region46: #{tpu_custom_call.1} parent=5 // pred_check_branch
        %530 = sbr.rel (%p528) target = $region48
      $region47: #{tpu_custom_call.1} parent=5 // pred_region
        %s531 = ssub.s32 %s18, 2
        // Predicated region
        $region49: #{tpu_custom_call.1} parent=47 // pred_check
          %p532 = pneg %p138
        $region50: #{tpu_custom_call.1} parent=47 // pred_check_branch
          %534 = sbr.rel (%p532) target = $region52
        $region51: #{tpu_custom_call.1} parent=47 // pred_region
          %s535 = sand.u32 %s123, 1
          %s536 = scalar_lea.sflag [#allocation4], %s535
          %s537 = sand.u32 %s123, 1
          %s538 = smul.addr %s537, 64
          %s539 = scalar_lea.vmem [#allocation7], %s538
          %540 = dma.done %s536, 1024
        $region52: #{tpu_custom_call.1} parent=47 // pred_fallthru
          _
      $region48: #{tpu_custom_call.1} parent=5 // pred_fallthru
        _
    $region6: #{tpu_custom_call.1} parent=1 // loop_footer
      %s22 = sadd.s32 1, %s18
    $region7: #{tpu_custom_call.1} parent=1 // loop_footer_branch
      %17 = sbr.rel target = $region3
    $region8: #{tpu_custom_call.1} parent=1 // loop_exit
      _
    %541 = vsyncpa [#allocation3], 1
    %s542 = scalar_lea.sflag [#allocation3], 1
    %543 = vsyncpa %s542, 1
    %544 = vsyncpa [#allocation6], 1
    %s545 = scalar_lea.sflag [#allocation6], 1
    %546 = vsyncpa %s545, 1
    %547 = vsyncpa [#allocation4], 1
    %s548 = scalar_lea.sflag [#allocation4], 1
    %549 = vsyncpa %s548, 1

</llo_original>
